<compile_context>
chip_gen: v6e
topology: v6e:2x2x1
jax: 0.10.0
libtpu: 0.0.40
codegen_flags: <defaults>
</compile_context>

<pallas_src>
import functools
import math

import jax
import jax.numpy as jnp
from jax import lax
from jax.experimental import pallas as pl
from jax.experimental.pallas import tpu as pltpu

_LOG_2PI = math.log(2.0 * math.pi)
_UNROLL_MAX_D = 32          # static Python unroll up to here; fori_loop above


def _cdiv(a, b):
    return -(-a // b)


def _round_up(x, m):
    return _cdiv(x, m) * m


def _finalize(mahal, diag, tld, valid, *, lambda_reg, min_diag_eps):
    """Per-lane loss from the Mahalanobis term and diag(L); invalid lanes -> 0."""
    D = diag.shape[0]
    logd = jnp.log(diag)                                            # [D, TB]
    half_log_det = jnp.sum(logd, axis=0, keepdims=True)             # unclamped (MVN.log_prob)
    logd_clamped = jnp.where(diag < min_diag_eps, math.log(min_diag_eps), logd)
    pred_log_det = 2.0 * jnp.sum(logd_clamped, axis=0, keepdims=True)
    nll = 0.5 * (D * _LOG_2PI + mahal) + half_log_det               # [1, TB]
    ld_diff = pred_log_det - tld
    total = nll + (0.5 * lambda_reg) * ld_diff * ld_diff
    # Garbage in overhanging (invalid) lanes never crosses lanes; select it away here.
    return jnp.where(valid, total, 0.0)


def _nll_kernel_unrolled(diff_ref, lcol_ref, diag_ref, tld_ref, out_ref, *,
                         batch_size, lambda_reg, min_diag_eps):
    """Small-D path: fully unrolled full-tile column sweep."""
    D, TB = diff_ref.shape
    diff = diff_ref[...].astype(jnp.float32)        # [D, TB]
    diag = diag_ref[...].astype(jnp.float32)        # [D, TB]
    tld = tld_ref[...].astype(jnp.float32)          # [1, TB]

    lane = lax.broadcasted_iota(jnp.int32, (1, TB), 1)
    valid = (pl.program_id(0) * TB + lane) < batch_size

    inv_diag = 1.0 / diag                           # one full-tile divide

    # Forward substitution (L z = diff), column sweep over the whole [D, TB] tile:
    #   z_j = s_j / L_jj ;  s -= L[:, j] * z_j
    # No strictly-lower masking: rows <= j of s are never read after iteration j, so
    # the unmasked update only pollutes dead rows (matches solve_triangular semantics).
    s = diff
    mahal = jnp.zeros((1, TB), jnp.float32)
    for j in range(D):
        z_j = s[j:j + 1, :] * inv_diag[j:j + 1, :]                  # [1, TB]
        mahal = mahal + z_j * z_j
        if j < D - 1:
            col = lcol_ref[j * D:(j + 1) * D, :].astype(jnp.float32)   # column j of L
            s = s - col * z_j

    total = _finalize(mahal, diag, tld, valid,
                      lambda_reg=lambda_reg, min_diag_eps=min_diag_eps)
    out_ref[...] = total.reshape(1, 1, TB)          # lane-dense per-tile output


def _nll_kernel_fori(diff_ref, lcol_ref, diag_ref, tld_ref, out_ref, s_ref, *,
                     col_stride, batch_size, lambda_reg, min_diag_eps):
    """Large-D path: fori_loop column sweep, s kept in VMEM scratch, aligned col slices."""
    D, TB = diff_ref.shape
    diag = diag_ref[...].astype(jnp.float32)
    tld = tld_ref[...].astype(jnp.float32)

    lane = lax.broadcasted_iota(jnp.int32, (1, TB), 1)
    valid = (pl.program_id(0) * TB + lane) < batch_size

    s_ref[...] = diff_ref[...].astype(jnp.float32)

    def body(j, mahal):
        z_j = s_ref[pl.ds(j, 1), :] / diag_ref[pl.ds(j, 1), :].astype(jnp.float32)
        start = pl.multiple_of(j * col_stride, 8)   # col_stride is a multiple of 8
        col = lcol_ref[pl.ds(start, D), :].astype(jnp.float32)
        s_ref[...] = s_ref[...] - col * z_j         # rows <= j are dead; no masking needed
        return mahal + z_j * z_j

    mahal = lax.fori_loop(0, D, body, jnp.zeros((1, TB), jnp.float32), unroll=4)

    total = _finalize(mahal, diag, tld, valid,
                      lambda_reg=lambda_reg, min_diag_eps=min_diag_eps)
    out_ref[...] = total.reshape(1, 1, TB)


def _vmem_capacity_bytes():
    try:
        return int(pltpu.get_tpu_info().vmem_capacity_bytes)
    except Exception:
        return 64 * 1024 * 1024    # v7x physical VMEM; safe lower bound for all gens


def _pick_batch_tile(batch, D, col_stride, itemsize, vmem_cap):
    # Bytes of input staged per batch lane per grid step (L + diff + diag, input dtype; tld f32).
    in_lane = (D * col_stride + 2 * D) * itemsize + 4
    work_lane = (3 * D + 8) * 4                         # rough in-kernel f32 working set per lane
    budget = min(24 << 20, int(0.4 * vmem_cap))         # budget for double-buffered inputs
    tb = budget // (2 * in_lane + work_lane)
    tb = max(128, (tb // 128) * 128)
    # Keep >=2 grid tiles when the batch allows it so the "parallel" axis can shard
    # across v7x's two TensorCores (costs nothing on single-TC v5e/v6e).
    tb = min(tb, max(128, _round_up(_cdiv(batch, 2), 128)))
    return tb


def reweighted_nll_full_covariance(means_pred, L_pred, targets, target_log_dets,
                                   *, lambda_reg, min_diag_L_eps=1e-7):
    """means_pred/targets: [B, D]; L_pred: [B, D, D]; target_log_dets: [B] -> scalar f32 loss."""
    if lambda_reg < 0:
        raise ValueError("lambda_reg must be non-negative.")
    B, D = means_pred.shape

    itemsize = jnp.dtype(L_pred.dtype).itemsize
    if D <= _UNROLL_MAX_D:
        unrolled, col_stride = True, D
    else:
        pack = max(8, 32 // itemsize)                   # sublane packing: 8 f32 / 16 bf16 / 32 int8
        unrolled, col_stride = False, _round_up(D, pack)

    vmem_cap = _vmem_capacity_bytes()
    TB = _pick_batch_tile(B, D, col_stride, itemsize, vmem_cap)
    num_tiles = _cdiv(B, TB)        # ragged trailing tile handled by the in-kernel lane mask

    # Feature-major relayout: batch on the 128-wide lane axis, each column of L a
    # contiguous sublane block.  diff is pre-folded into this (fused) transpose pass.
    # TODO(synk): the transpose of L is still one extra HBM read+write of the largest
    # input; ideally the producer emits column-major / feature-major L directly.
    diff_t = jnp.transpose(targets - means_pred)                          # [D, B]
    diag_t = jnp.transpose(jnp.diagonal(L_pred, axis1=-2, axis2=-1))      # [D, B]
    l_cm = jnp.transpose(L_pred, (2, 1, 0))                               # [col, row, B]
    if col_stride != D:
        l_cm = jnp.pad(l_cm, ((0, 0), (0, col_stride - D), (0, 0)))       # sublane-align columns
    l_cm = l_cm.reshape(D * col_stride, B)                                # [D*col_stride, B]
    tld_t = target_log_dets.reshape(1, B)                                 # [1, B]

    if unrolled:
        kernel = functools.partial(
            _nll_kernel_unrolled, batch_size=B,
            lambda_reg=float(lambda_reg), min_diag_eps=float(min_diag_L_eps))
        scratch_shapes = []
    else:
        kernel = functools.partial(
            _nll_kernel_fori, col_stride=col_stride, batch_size=B,
            lambda_reg=float(lambda_reg), min_diag_eps=float(min_diag_L_eps))
        scratch_shapes = [pltpu.VMEM((D, TB), jnp.float32)]

    # Explicit scoped-VMEM limit: double-buffered inputs + scratch + headroom, capped
    # below physical capacity (v5e/v6e: 128 MiB, v7x: 64 MiB).
    in_block_bytes = TB * ((D * col_stride + 2 * D) * itemsize + 4)
    scratch_bytes = 0 if unrolled else D * TB * 4
    want = 2 * in_block_bytes + scratch_bytes + (8 << 20)
    vmem_limit = int(min(0.9 * vmem_cap, max(32 << 20, want)))
    # TODO(synk): for very large D (D^2 * TB * itemsize approaching physical VMEM) add a
    # second "arbitrary" grid axis over column-blocks of L with s/mahal carried in scratch.

    partials = pl.pallas_call(
        kernel,
        out_shape=jax.ShapeDtypeStruct((num_tiles, 1, TB), jnp.float32),
        grid_spec=pltpu.PrefetchScalarGridSpec(
            num_scalar_prefetch=0,
            grid=(num_tiles,),
            in_specs=[
                pl.BlockSpec((D, TB), lambda i: (0, i)),                # diff = targets - means
                pl.BlockSpec((D * col_stride, TB), lambda i: (0, i)),   # L, column-major flat
                pl.BlockSpec((D, TB), lambda i: (0, i)),                # diag(L)
                pl.BlockSpec((1, TB), lambda i: (0, i)),                # target log-dets
            ],
            out_specs=pl.BlockSpec((1, 1, TB), lambda i: (i, 0, 0)),
            scratch_shapes=scratch_shapes,
        ),
        compiler_params=pltpu.CompilerParams(
            dimension_semantics=("parallel",),
            vmem_limit_bytes=vmem_limit),
    )(diff_t, l_cm, diag_t, tld_t)

    return jnp.sum(partials) / B


def _reference(means, L, targets, tld, lambda_reg, eps):
    """Pure-JAX reference matching torch.distributions.MultivariateNormal.log_prob."""
    D = means.shape[-1]
    diff = targets - means
    z = jax.vmap(lambda Lb, db: jax.scipy.linalg.solve_triangular(Lb, db, lower=True))(L, diff)
    mahal = jnp.sum(z * z, axis=-1)
    diag = jnp.diagonal(L, axis1=-2, axis2=-1)
    half_log_det = jnp.sum(jnp.log(diag), axis=-1)
    nll = 0.5 * (D * jnp.log(2.0 * jnp.pi) + mahal) + half_log_det
    pred_ld = 2.0 * jnp.sum(jnp.log(jnp.maximum(diag, eps)), axis=-1)
    reg = 0.5 * lambda_reg * (pred_ld - tld) ** 2
    return jnp.mean(nll + reg)


if __name__ == "__main__":
    key = jax.random.PRNGKey(0)
    B, D = 8, 8  # batch_size, num_features
    k1, k2, k3, k4, k5 = jax.random.split(key, 5)

    means_pred = jax.random.normal(k1, (B, D), jnp.float32)
    targets = means_pred + 0.3 * jax.random.normal(k2, (B, D), jnp.float32)

    # Deterministic lower-triangular Cholesky factor with strictly positive diagonal.
    strict_lower = jnp.tril(jax.random.normal(k3, (B, D, D), jnp.float32), k=-1) * 0.1
    diag_vals = jax.nn.softplus(jax.random.normal(k4, (B, D), jnp.float32)) + 0.1
    L_pred = strict_lower + jax.vmap(jnp.diag)(diag_vals)

    target_log_dets = (2.0 * jnp.sum(jnp.log(diag_vals), axis=-1)
                       + 0.05 * jax.random.normal(k5, (B,), jnp.float32))

    lambda_reg = 0.5
    loss = reweighted_nll_full_covariance(
        means_pred, L_pred, targets, target_log_dets,
        lambda_reg=lambda_reg, min_diag_L_eps=1e-7)
    loss = jax.block_until_ready(loss)

    ref = _reference(means_pred, L_pred, targets, target_log_dets, lambda_reg, 1e-7)
    assert jnp.allclose(loss, ref, rtol=1e-3, atol=1e-3), (float(loss), float(ref))
    print("KERNEL_OK")
</pallas_src>

<mosaic_0001>
module attributes {stable_mosaic.version = 11 : i64} {
  func.func @_nll_kernel_unrolled(%arg0: i32, %arg1: memref<8x128xf32, #tpu.memory_space<vmem>>, %arg2: memref<64x128xf32, #tpu.memory_space<vmem>>, %arg3: memref<8x128xf32, #tpu.memory_space<vmem>>, %arg4: memref<1x128xf32, #tpu.memory_space<vmem>>, %arg5: memref<1x1x128xf32, #tpu.memory_space<vmem>>) attributes {dimension_semantics = [#tpu.dimension_semantics<parallel>], iteration_bounds = array<i64: 1>, scalar_prefetch = 0 : i64, scratch_operands = 0 : i64, tpu.core_type = #tpu.core_type<tc>, window_params = [{transform_indices = @transform_0, window_bounds = array<i64: 8, 128>}, {transform_indices = @transform_1, window_bounds = array<i64: 64, 128>}, {transform_indices = @transform_2, window_bounds = array<i64: 8, 128>}, {transform_indices = @transform_3, window_bounds = array<i64: 1, 128>}, {transform_indices = @transform_4, window_bounds = array<i64: 1, 1, 128>}]} {
    %c0 = arith.constant 0 : index
    %c0_0 = arith.constant 0 : index
    %0 = vector.load %arg1[%c0, %c0_0] : memref<8x128xf32, #tpu.memory_space<vmem>>, vector<8x128xf32>
    %c0_1 = arith.constant 0 : index
    %c0_2 = arith.constant 0 : index
    %1 = vector.load %arg3[%c0_1, %c0_2] : memref<8x128xf32, #tpu.memory_space<vmem>>, vector<8x128xf32>
    %c0_3 = arith.constant 0 : index
    %c0_4 = arith.constant 0 : index
    %2 = vector.load %arg4[%c0_3, %c0_4] : memref<1x128xf32, #tpu.memory_space<vmem>>, vector<1x128xf32>
    %3 = tpu.iota {dimensions = array<i32: 1>} : vector<1x128xi32>
    %c128_i32 = arith.constant 128 : i32
    %4 = arith.muli %arg0, %c128_i32 : i32
    %5 = vector.broadcast %4 : i32 to vector<1x128xi32>
    %6 = arith.addi %5, %3 : vector<1x128xi32>
    %c8_i32 = arith.constant 8 : i32
    %7 = vector.broadcast %c8_i32 : i32 to vector<1x128xi32>
    %8 = arith.cmpi slt, %6, %7 : vector<1x128xi32>
    %cst = arith.constant 1.000000e+00 : f32
    %9 = vector.broadcast %cst : f32 to vector<8x128xf32>
    %10 = arith.divf %9, %1 : vector<8x128xf32>
    %cst_5 = arith.constant 0.000000e+00 : f32
    %11 = vector.broadcast %cst_5 : f32 to vector<1x128xf32>
    %12 = vector.extract_strided_slice %0 {offsets = [0, 0], sizes = [1, 128], strides = [1, 1]} : vector<8x128xf32> to vector<1x128xf32>
    %13 = vector.extract_strided_slice %10 {offsets = [0, 0], sizes = [1, 128], strides = [1, 1]} : vector<8x128xf32> to vector<1x128xf32>
    %14 = arith.mulf %12, %13 : vector<1x128xf32>
    %15 = arith.mulf %14, %14 : vector<1x128xf32>
    %16 = arith.addf %11, %15 : vector<1x128xf32>
    %c0_6 = arith.constant 0 : index
    %c0_7 = arith.constant 0 : index
    %17 = vector.load %arg2[%c0_6, %c0_7] : memref<64x128xf32, #tpu.memory_space<vmem>>, vector<8x128xf32>
    %18 = vector.broadcast %14 : vector<1x128xf32> to vector<8x128xf32>
    %19 = arith.mulf %17, %18 : vector<8x128xf32>
    %20 = arith.subf %0, %19 : vector<8x128xf32>
    %21 = vector.extract_strided_slice %20 {offsets = [1, 0], sizes = [1, 128], strides = [1, 1]} : vector<8x128xf32> to vector<1x128xf32>
    %22 = vector.extract_strided_slice %10 {offsets = [1, 0], sizes = [1, 128], strides = [1, 1]} : vector<8x128xf32> to vector<1x128xf32>
    %23 = arith.mulf %21, %22 : vector<1x128xf32>
    %24 = arith.mulf %23, %23 : vector<1x128xf32>
    %25 = arith.addf %16, %24 : vector<1x128xf32>
    %c8 = arith.constant 8 : index
    %c0_8 = arith.constant 0 : index
    %26 = vector.load %arg2[%c8, %c0_8] : memref<64x128xf32, #tpu.memory_space<vmem>>, vector<8x128xf32>
    %27 = vector.broadcast %23 : vector<1x128xf32> to vector<8x128xf32>
    %28 = arith.mulf %26, %27 : vector<8x128xf32>
    %29 = arith.subf %20, %28 : vector<8x128xf32>
    %30 = vector.extract_strided_slice %29 {offsets = [2, 0], sizes = [1, 128], strides = [1, 1]} : vector<8x128xf32> to vector<1x128xf32>
    %31 = vector.extract_strided_slice %10 {offsets = [2, 0], sizes = [1, 128], strides = [1, 1]} : vector<8x128xf32> to vector<1x128xf32>
    %32 = arith.mulf %30, %31 : vector<1x128xf32>
    %33 = arith.mulf %32, %32 : vector<1x128xf32>
    %34 = arith.addf %25, %33 : vector<1x128xf32>
    %c16 = arith.constant 16 : index
    %c0_9 = arith.constant 0 : index
    %35 = vector.load %arg2[%c16, %c0_9] : memref<64x128xf32, #tpu.memory_space<vmem>>, vector<8x128xf32>
    %36 = vector.broadcast %32 : vector<1x128xf32> to vector<8x128xf32>
    %37 = arith.mulf %35, %36 : vector<8x128xf32>
    %38 = arith.subf %29, %37 : vector<8x128xf32>
    %39 = vector.extract_strided_slice %38 {offsets = [3, 0], sizes = [1, 128], strides = [1, 1]} : vector<8x128xf32> to vector<1x128xf32>
    %40 = vector.extract_strided_slice %10 {offsets = [3, 0], sizes = [1, 128], strides = [1, 1]} : vector<8x128xf32> to vector<1x128xf32>
    %41 = arith.mulf %39, %40 : vector<1x128xf32>
    %42 = arith.mulf %41, %41 : vector<1x128xf32>
    %43 = arith.addf %34, %42 : vector<1x128xf32>
    %c24 = arith.constant 24 : index
    %c0_10 = arith.constant 0 : index
    %44 = vector.load %arg2[%c24, %c0_10] : memref<64x128xf32, #tpu.memory_space<vmem>>, vector<8x128xf32>
    %45 = vector.broadcast %41 : vector<1x128xf32> to vector<8x128xf32>
    %46 = arith.mulf %44, %45 : vector<8x128xf32>
    %47 = arith.subf %38, %46 : vector<8x128xf32>
    %48 = vector.extract_strided_slice %47 {offsets = [4, 0], sizes = [1, 128], strides = [1, 1]} : vector<8x128xf32> to vector<1x128xf32>
    %49 = vector.extract_strided_slice %10 {offsets = [4, 0], sizes = [1, 128], strides = [1, 1]} : vector<8x128xf32> to vector<1x128xf32>
    %50 = arith.mulf %48, %49 : vector<1x128xf32>
    %51 = arith.mulf %50, %50 : vector<1x128xf32>
    %52 = arith.addf %43, %51 : vector<1x128xf32>
    %c32 = arith.constant 32 : index
    %c0_11 = arith.constant 0 : index
    %53 = vector.load %arg2[%c32, %c0_11] : memref<64x128xf32, #tpu.memory_space<vmem>>, vector<8x128xf32>
    %54 = vector.broadcast %50 : vector<1x128xf32> to vector<8x128xf32>
    %55 = arith.mulf %53, %54 : vector<8x128xf32>
    %56 = arith.subf %47, %55 : vector<8x128xf32>
    %57 = vector.extract_strided_slice %56 {offsets = [5, 0], sizes = [1, 128], strides = [1, 1]} : vector<8x128xf32> to vector<1x128xf32>
    %58 = vector.extract_strided_slice %10 {offsets = [5, 0], sizes = [1, 128], strides = [1, 1]} : vector<8x128xf32> to vector<1x128xf32>
    %59 = arith.mulf %57, %58 : vector<1x128xf32>
    %60 = arith.mulf %59, %59 : vector<1x128xf32>
    %61 = arith.addf %52, %60 : vector<1x128xf32>
    %c40 = arith.constant 40 : index
    %c0_12 = arith.constant 0 : index
    %62 = vector.load %arg2[%c40, %c0_12] : memref<64x128xf32, #tpu.memory_space<vmem>>, vector<8x128xf32>
    %63 = vector.broadcast %59 : vector<1x128xf32> to vector<8x128xf32>
    %64 = arith.mulf %62, %63 : vector<8x128xf32>
    %65 = arith.subf %56, %64 : vector<8x128xf32>
    %66 = vector.extract_strided_slice %65 {offsets = [6, 0], sizes = [1, 128], strides = [1, 1]} : vector<8x128xf32> to vector<1x128xf32>
    %67 = vector.extract_strided_slice %10 {offsets = [6, 0], sizes = [1, 128], strides = [1, 1]} : vector<8x128xf32> to vector<1x128xf32>
    %68 = arith.mulf %66, %67 : vector<1x128xf32>
    %69 = arith.mulf %68, %68 : vector<1x128xf32>
    %70 = arith.addf %61, %69 : vector<1x128xf32>
    %c48 = arith.constant 48 : index
    %c0_13 = arith.constant 0 : index
    %71 = vector.load %arg2[%c48, %c0_13] : memref<64x128xf32, #tpu.memory_space<vmem>>, vector<8x128xf32>
    %72 = vector.broadcast %68 : vector<1x128xf32> to vector<8x128xf32>
    %73 = arith.mulf %71, %72 : vector<8x128xf32>
    %74 = arith.subf %65, %73 : vector<8x128xf32>
    %75 = vector.extract_strided_slice %74 {offsets = [7, 0], sizes = [1, 128], strides = [1, 1]} : vector<8x128xf32> to vector<1x128xf32>
    %76 = vector.extract_strided_slice %10 {offsets = [7, 0], sizes = [1, 128], strides = [1, 1]} : vector<8x128xf32> to vector<1x128xf32>
    %77 = arith.mulf %75, %76 : vector<1x128xf32>
    %78 = arith.mulf %77, %77 : vector<1x128xf32>
    %79 = arith.addf %70, %78 : vector<1x128xf32>
    %80 = math.log %1 : vector<8x128xf32>
    %cst_14 = arith.constant dense<0.000000e+00> : vector<128xf32>
    %81 = vector.multi_reduction <add>, %80, %cst_14 [0] : vector<8x128xf32> to vector<128xf32>
    %82 = vector.shape_cast %81 : vector<128xf32> to vector<1x128xf32>
    %cst_15 = arith.constant 1.000000e-07 : f32
    %83 = vector.broadcast %cst_15 : f32 to vector<8x128xf32>
    %84 = arith.cmpf olt, %1, %83 : vector<8x128xf32>
    %cst_16 = arith.constant -16.1180954 : f32
    %85 = vector.broadcast %cst_16 : f32 to vector<8x128xf32>
    %86 = arith.select %84, %85, %80 : vector<8x128xi1>, vector<8x128xf32>
    %cst_17 = arith.constant dense<0.000000e+00> : vector<128xf32>
    %87 = vector.multi_reduction <add>, %86, %cst_17 [0] : vector<8x128xf32> to vector<128xf32>
    %88 = vector.shape_cast %87 : vector<128xf32> to vector<1x128xf32>
    %cst_18 = arith.constant 2.000000e+00 : f32
    %89 = vector.broadcast %cst_18 : f32 to vector<1x128xf32>
    %90 = arith.mulf %89, %88 : vector<1x128xf32>
    %cst_19 = arith.constant 14.7030163 : f32
    %91 = vector.broadcast %cst_19 : f32 to vector<1x128xf32>
    %92 = arith.addf %91, %79 : vector<1x128xf32>
    %cst_20 = arith.constant 5.000000e-01 : f32
    %93 = vector.broadcast %cst_20 : f32 to vector<1x128xf32>
    %94 = arith.mulf %93, %92 : vector<1x128xf32>
    %95 = arith.addf %94, %82 : vector<1x128xf32>
    %96 = arith.subf %90, %2 : vector<1x128xf32>
    %cst_21 = arith.constant 2.500000e-01 : f32
    %97 = vector.broadcast %cst_21 : f32 to vector<1x128xf32>
    %98 = arith.mulf %97, %96 : vector<1x128xf32>
    %99 = arith.mulf %98, %96 : vector<1x128xf32>
    %100 = arith.addf %95, %99 : vector<1x128xf32>
    %cst_22 = arith.constant 0.000000e+00 : f32
    %101 = vector.broadcast %cst_22 : f32 to vector<1x128xf32>
    %102 = arith.select %8, %100, %101 : vector<1x128xi1>, vector<1x128xf32>
    %103 = vector.shape_cast %102 : vector<1x128xf32> to vector<1x1x128xf32>
    %c0_23 = arith.constant 0 : index
    %c0_24 = arith.constant 0 : index
    %c0_25 = arith.constant 0 : index
    %104 = vector.load %arg5[%c0_23, %c0_24, %c0_25] : memref<1x1x128xf32, #tpu.memory_space<vmem>>, vector<1x1x128xf32>
    tpu.vector_store %arg5[%c0_23, %c0_24, %c0_25], %103 {strides = array<i32>} : memref<1x1x128xf32, #tpu.memory_space<vmem>>, vector<1x1x128xf32>,
    return
  }
  func.func @transform_0(%arg0: i32) -> (i32, i32) {
    %c0_i32 = arith.constant 0 : i32
    %c0_i32_0 = arith.constant 0 : i32
    return %c0_i32, %arg0 : i32, i32
  }
  func.func @transform_1(%arg0: i32) -> (i32, i32) {
    %c0_i32 = arith.constant 0 : i32
    %c0_i32_0 = arith.constant 0 : i32
    return %c0_i32, %arg0 : i32, i32
  }
  func.func @transform_2(%arg0: i32) -> (i32, i32) {
    %c0_i32 = arith.constant 0 : i32
    %c0_i32_0 = arith.constant 0 : i32
    return %c0_i32, %arg0 : i32, i32
  }
  func.func @transform_3(%arg0: i32) -> (i32, i32) {
    %c0_i32 = arith.constant 0 : i32
    %c0_i32_0 = arith.constant 0 : i32
    return %c0_i32, %arg0 : i32, i32
  }
  func.func @transform_4(%arg0: i32) -> (i32, i32, i32) {
    %c0_i32 = arith.constant 0 : i32
    %c0_i32_0 = arith.constant 0 : i32
    %c0_i32_1 = arith.constant 0 : i32
    return %arg0, %c0_i32, %c0_i32_0 : i32, i32, i32
  }
}

</mosaic_0001>

<llo_original>
// kernel: tpu_custom_call.1
$region0: #{tpu_custom_call.1}
  #allocation0 [shape = 'u32[]', space=smem, size = 0x4, offset = 0x4, fixed_abs, tag = 'smem constant byte address 0x4 - core index']
  #allocation1 [shape = 'u32[144,128]{1,0:T(1,128)}', space=vmem, size = 0x12000, scoped, tag = 'internal scratch']
  %s0 = inlined_call_operand.vmem [shape: f32[8,8], index: 0, kind: input, shape index: {}]
  %s1 = inlined_call_operand.vmem [shape: f32[64,8], index: 1, kind: input, shape index: {}]
  %s2 = inlined_call_operand.vmem [shape: f32[8,8], index: 2, kind: input, shape index: {}]
  %s3 = inlined_call_operand.vmem [shape: f32[1,8], index: 3, kind: input, shape index: {}]
  %s4 = inlined_call_operand.hbm [shape: f32[1,1,128], index: 4, kind: output, shape index: {}]
  %s5 = sld [smem:[#allocation0]]
  $region26: #{tpu_custom_call.1} parent=0
    _
  %s7 = ssub.s32 1, %s5
  %s8 = scalar_select 0, %s7, %s5
  $region1: #{tpu_custom_call.1} parent=0
    #allocation2 [shape = 'u8[512]{0}', space=vmem, size = 0x400, scoped, tag = 'output window, operand 0, single buffered']
    #allocation3 [shape = 's32[1]{0}', space=sflag, size = 0x4, scoped, tag = 'scoped memory for tpu_custom_call.1']
    %9 = vsyncpa [#allocation3], 0
    // Predicated region
    $region2: #{tpu_custom_call.1} parent=1 // pred_check
      _
    $region3: #{tpu_custom_call.1} parent=1 // pred_check_branch
      %11 = sbr.rel (0) target = $region5
    $region4: #{tpu_custom_call.1} parent=1 // pred_region
      _
    $region5: #{tpu_custom_call.1} parent=1 // pred_fallthru
      _
    // Predicated region
    $region6: #{tpu_custom_call.1} parent=1 // pred_check
      _
    $region7: #{tpu_custom_call.1} parent=1 // pred_check_branch
      %13 = sbr.rel (0) target = $region9
    $region8: #{tpu_custom_call.1} parent=1 // pred_region
      _
    $region9: #{tpu_custom_call.1} parent=1 // pred_fallthru
      _
    // Predicated region
    $region10: #{tpu_custom_call.1} parent=1 // pred_check
      _
    $region11: #{tpu_custom_call.1} parent=1 // pred_check_branch
      %15 = sbr.rel (0) target = $region13
    $region12: #{tpu_custom_call.1} parent=1 // pred_region
      _
    $region13: #{tpu_custom_call.1} parent=1 // pred_fallthru
      _
    // Predicated region
    $region14: #{tpu_custom_call.1} parent=1 // pred_check
      _
    $region15: #{tpu_custom_call.1} parent=1 // pred_check_branch
      %17 = sbr.rel (0) target = $region17
    $region16: #{tpu_custom_call.1} parent=1 // pred_region
      _
    $region17: #{tpu_custom_call.1} parent=1 // pred_fallthru
      _
    %v18 = vld [vmem:[%s0] sm:$0xff]
    %v19 = vld [vmem:[%s2] sm:$0xff]
    %v20 = vld [vmem:[%s3] sm:$0x1]
    %v21 = vlaneseq
    %v22 = vand.u32 %v21, 127
    %s23 = smul.u32 0, 128
    %v24 = vstv %s23
    %v25 = vadd.s32 %v24, %v22
    %vm26 = vcmp.lt.s32.totalorder %v25, 8
    %v27 = vrcp.pop %v19
    %v28 = vmul.f32 1.0, %v27
    %v29 = vmul.f32 %v18, %v28
    %v30 = vmul.f32 %v29, %v29
    %v31 = vadd.f32 %v30, 0.0
    %v32 = vld [vmem:[%s1] sm:$0xff]
    %v33 = vlaneseq
    %v34 = vshrl.u32 %v33, 7
    %v35 = vsub.s32 0, %v34
    %v36 = vrot.slane %v29, %v35
    %v37 = vmul.f32 %v32, %v36
    %v38 = vsub.f32 %v18, %v37
    %v39 = vmul.f32 %v38, %v28
    %v40 = vmul.f32 %v39, %v39
    %v42 = vrot.slane %v40, 1
    %v44 = vadd.f32 %v31, %v42
    %v45 = vld [vmem:[%s1 + $0x8] sm:$0xff]
    %v46 = vlaneseq
    %v47 = vshrl.u32 %v46, 7
    %v48 = vsub.s32 1, %v47
    %v49 = vrot.slane %v39, %v48
    %v50 = vmul.f32 %v45, %v49
    %v51 = vsub.f32 %v38, %v50
    %v52 = vmul.f32 %v51, %v28
    %v53 = vmul.f32 %v52, %v52
    %v55 = vrot.slane %v53, 2
    %v57 = vadd.f32 %v44, %v55
    %v58 = vld [vmem:[%s1 + $0x10] sm:$0xff]
    %v59 = vlaneseq
    %v60 = vshrl.u32 %v59, 7
    %v61 = vsub.s32 2, %v60
    %v62 = vrot.slane %v52, %v61
    %v63 = vmul.f32 %v58, %v62
    %v64 = vsub.f32 %v51, %v63
    %v65 = vmul.f32 %v64, %v28
    %v66 = vmul.f32 %v65, %v65
    %v68 = vrot.slane %v66, 3
    %v70 = vadd.f32 %v57, %v68
    %v71 = vld [vmem:[%s1 + $0x18] sm:$0xff]
    %v72 = vlaneseq
    %v73 = vshrl.u32 %v72, 7
    %v74 = vsub.s32 3, %v73
    %v75 = vrot.slane %v65, %v74
    %v76 = vmul.f32 %v71, %v75
    %v77 = vsub.f32 %v64, %v76
    %v78 = vmul.f32 %v77, %v28
    %v79 = vmul.f32 %v78, %v78
    %v81 = vrot.slane %v79, 4
    %v83 = vadd.f32 %v70, %v81
    %v84 = vld [vmem:[%s1 + $0x20] sm:$0xff]
    %v85 = vlaneseq
    %v86 = vshrl.u32 %v85, 7
    %v87 = vsub.s32 4, %v86
    %v88 = vrot.slane %v78, %v87
    %v89 = vmul.f32 %v84, %v88
    %v90 = vsub.f32 %v77, %v89
    %v91 = vmul.f32 %v90, %v28
    %v92 = vmul.f32 %v91, %v91
    %v94 = vrot.slane %v92, 5
    %v96 = vadd.f32 %v83, %v94
    %v97 = vld [vmem:[%s1 + $0x28] sm:$0xff]
    %v98 = vlaneseq
    %v99 = vshrl.u32 %v98, 7
    %v100 = vsub.s32 5, %v99
    %v101 = vrot.slane %v91, %v100
    %v102 = vmul.f32 %v97, %v101
    %v103 = vsub.f32 %v90, %v102
    %v104 = vmul.f32 %v103, %v28
    %v105 = vmul.f32 %v104, %v104
    %v107 = vrot.slane %v105, 6
    %v109 = vadd.f32 %v96, %v107
    %v110 = vld [vmem:[%s1 + $0x30] sm:$0xff]
    %v111 = vlaneseq
    %v112 = vshrl.u32 %v111, 7
    %v113 = vsub.s32 6, %v112
    %v114 = vrot.slane %v104, %v113
    %v115 = vmul.f32 %v110, %v114
    %v116 = vsub.f32 %v103, %v115
    %v117 = vmul.f32 %v116, %v28
    %v118 = vmul.f32 %v117, %v117
    %v120 = vrot.slane %v118, 7
    %v122 = vadd.f32 %v109, %v120
    %v123 = vlog2.pop %v19
    %v124 = vmul.f32 %v123, 0.6931472
    %v125 = vrot.slane %v124, 4
    %v126 = vadd.f32 %v124, %v125
    %v127 = vrot.slane %v126, 2
    %v128 = vadd.f32 %v126, %v127
    %v129 = vrot.slane %v128, 1
    %v130 = vadd.f32 %v128, %v129
    %vm131 = vcmp.lt.f32.partialorder %v19, 1e-07
    %v132 = vsel %vm131, -16.118095, %v124
    %v133 = vrot.slane %v132, 4
    %v134 = vadd.f32 %v132, %v133
    %v135 = vrot.slane %v134, 2
    %v136 = vadd.f32 %v134, %v135
    %v137 = vrot.slane %v136, 1
    %v138 = vadd.f32 %v136, %v137
    %v139 = vmul.f32 %v138, 2.0
    %v140 = vadd.f32 %v122, 14.703016
    %v141 = vmul.f32 %v140, 0.5
    %v142 = vadd.f32 %v141, %v130
    %v143 = vsub.f32 %v139, %v20
    %v144 = vmul.f32 %v143, 0.25
    %v145 = vmul.f32 %v144, %v143
    %v146 = vadd.f32 %v142, %v145
    %v147 = vsel %vm26, %v146, 0.0
    %148 = vst [vmem:[#allocation2] sm:$0x1] %v147
    // Predicated region
    $region18: #{tpu_custom_call.1} parent=1 // pred_check
      _
    $region19: #{tpu_custom_call.1} parent=1 // pred_check_branch
      %150 = sbr.rel (0) target = $region21
    $region20: #{tpu_custom_call.1} parent=1 // pred_region
      %s152 = ssub.s32 16, 16
      %153 = vsyncadd [#allocation3], %s152
      %s155 = sshll.u32 [#allocation2], 4
      %s156 = int_to_ptr.vmem [resolvable:$true] %s155
      %158 = dma.vmem_to_hbm [thread:$0]  %s156, 16, %s4, [#allocation3]
    $region21: #{tpu_custom_call.1} parent=1 // pred_fallthru
      _
    // Predicated region
    $region22: #{tpu_custom_call.1} parent=1 // pred_check
      _
    $region23: #{tpu_custom_call.1} parent=1 // pred_check_branch
      %160 = sbr.rel (0) target = $region25
    $region24: #{tpu_custom_call.1} parent=1 // pred_region
      %161 = dma.done [#allocation3], 16
    $region25: #{tpu_custom_call.1} parent=1 // pred_fallthru
      _
    %162 = vsyncpa [#allocation3], 1

</llo_original>
